<compile_context>
chip_gen: v7x
topology: tpu7x:2x2x1
jax: 0.10.0
libtpu: 0.0.40
codegen_flags: <defaults>
</compile_context>

<pallas_src>
import math

import jax
import jax.numpy as jnp
from jax import lax
from jax.experimental import pallas as pl
from jax.experimental.pallas import tpu as pltpu

# ---- problem sizes (small, consistent with the module) ----
B = 2            # batch
S = 8            # sequence length
D = 32           # d_model
DK = 16          # d_key
H = 2            # n_heads
MLP_F = 4        # mlp_factor
FF = MLP_F * D   # mlp hidden = 128
EPS = 1e-5
N = B * S
NEG = -1e30

# fused-QKV lane offsets in the (D, 2*H*DK + H*D) = (32, 128) weight:
#   [ q_0 | q_1 | k_0 | k_1 | v'_0 | v'_1 ]   with v'_h = Wv_h @ Wo_h (Wo folded in)
_Q0, _Q1 = 0, DK
_K0, _K1 = 2 * DK, 3 * DK
_V0, _V1 = 4 * DK, 4 * DK + D


def _ln_fused(x, gamma, beta):
    # one-pass LayerNorm: var = E[x^2] - mu^2 (independent reductions), fused scale + shift
    mu = jnp.mean(x, axis=-1, keepdims=True)
    var = jnp.mean(x * x, axis=-1, keepdims=True) - mu * mu
    s = gamma * lax.rsqrt(var + EPS)
    return x * s + (beta - mu * s)


def transformer_block_kernel(
    x_ref,        # (N, D)   = (16, 32)
    wqkv_ref,     # (D, 128) fused [Q|K|V'] weights, 1/sqrt(dk) folded into Q, Wo folded into V
    w1_ref,       # (D, FF)  = (32, 128)
    w2t_ref,      # (D, FF)  = (32, 128)  W2 transposed (lane-dense)
    vec128_ref,   # (2, 128) row0 = fused qkv bias, row1 = b1
    vec32_ref,    # (8, D)   rows = [ln1_g, ln1_b, ln2_g, ln2_b, bo, b2, 0, 0]
    mask_ref,     # (H*N, N) additive block-diagonal bias (0 / -1e30), tiled per head
    out_ref,      # (N, D)
):
    x = x_ref[...]
    vec32 = vec32_ref[...]
    vec128 = vec128_ref[...]
    ln1_g, ln1_b = vec32[0:1, :], vec32[1:2, :]
    ln2_g, ln2_b = vec32[2:3, :], vec32[3:4, :]
    bo, b2 = vec32[4:5, :], vec32[5:6, :]
    bqkv, b1 = vec128[0:1, :], vec128[1:2, :]

    dn = (((1,), (1,)), ((), ()))   # contract last dims of both operands (no K^T materialization)

    # ---- LayerNorm 1 + fused QKV projection: one (16,32)x(32,128) MXU call ----
    xn = _ln_fused(x, ln1_g, ln1_b)
    qkv = jnp.dot(xn, wqkv_ref[...], preferred_element_type=jnp.float32) + bqkv   # (16, 128)

    q0, q1 = qkv[:, _Q0:_Q0 + DK], qkv[:, _Q1:_Q1 + DK]      # already 1/sqrt(dk)-scaled
    k0, k1 = qkv[:, _K0:_K0 + DK], qkv[:, _K1:_K1 + DK]
    v0, v1 = qkv[:, _V0:_V0 + D], qkv[:, _V1:_V1 + D]        # Wo already applied

    # ---- both heads' scores, single merged softmax over a (2N, N) sublane-stacked slab ----
    s0 = lax.dot_general(q0, k0, dimension_numbers=dn, preferred_element_type=jnp.float32)
    s1 = lax.dot_general(q1, k1, dimension_numbers=dn, preferred_element_type=jnp.float32)
    s = jnp.concatenate([s0, s1], axis=0) + mask_ref[...]    # (32, 16), cross-batch entries ~ -1e30
    s = s - jnp.max(s, axis=-1, keepdims=True)
    e = jnp.exp(s)
    p = e * pl.reciprocal(jnp.sum(e, axis=-1, keepdims=True), approx=False)

    attn = (jnp.dot(p[0:N, :], v0, preferred_element_type=jnp.float32)
            + jnp.dot(p[N:2 * N, :], v1, preferred_element_type=jnp.float32)
            + bo)
    x1 = x + attn

    # ---- LayerNorm 2 + MLP (Linear -> SiLU -> Linear); dropouts are identity at inference ----
    xn2 = _ln_fused(x1, ln2_g, ln2_b)
    h1 = jnp.dot(xn2, w1_ref[...], preferred_element_type=jnp.float32) + b1       # (16, 128)
    h1 = h1 * jax.nn.sigmoid(h1)                                                   # SiLU
    mlp = lax.dot_general(h1, w2t_ref[...], dimension_numbers=dn,
                          preferred_element_type=jnp.float32) + b2                 # (16, 32)

    out_ref[...] = x1 + mlp


def _full_spec(shape):
    n = len(shape)
    return pl.BlockSpec(shape, lambda i, _n=n: (0,) * _n)


def transformer_block(x, params):
    (ln1_g, ln1_b, wq, bq, wk, bk, wv, bv, wo, bo,
     ln2_g, ln2_b, w1, b1, w2, b2) = params

    # ---- wrapper-side weight fusion (cheap one-time XLA ops, outside the kernel) ----
    scale = 1.0 / math.sqrt(float(DK))
    wo_h = wo.reshape(H, D, D)                       # per-head slices of the output projection
    wv_f = [wv[h] @ wo_h[h] for h in range(H)]       # Wv'_h = Wv_h @ Wo_h    (D, D)
    bv_f = [bv[h] @ wo_h[h] for h in range(H)]       # bv'_h = bv_h @ Wo_h    (1, D)
    wqkv = jnp.concatenate(
        [wq[0] * scale, wq[1] * scale, wk[0], wk[1], wv_f[0], wv_f[1]], axis=-1)   # (32, 128)
    bqkv = jnp.concatenate(
        [bq[0] * scale, bq[1] * scale, bk[0], bk[1], bv_f[0], bv_f[1]], axis=-1)   # (1, 128)

    vec128 = jnp.concatenate([bqkv, b1], axis=0)                                   # (2, 128)
    vec32 = jnp.concatenate(
        [ln1_g, ln1_b, ln2_g, ln2_b, bo, b2, jnp.zeros((2, D), jnp.float32)], axis=0)  # (8, 32)

    # additive block-diagonal mask: a query row may only attend within its own batch element;
    # tiled once per head for the merged (2N, N) softmax slab.
    tok = jnp.arange(N) // S
    base = jnp.where(tok[:, None] == tok[None, :], 0.0, NEG).astype(jnp.float32)   # (16, 16)
    mask = jnp.tile(base, (H, 1))                                                  # (32, 16)

    w2t = w2.T                                        # (D, FF) lane-dense
    x_rows = x.reshape(N, D)                          # free row-major reshape

    args = (x_rows, wqkv, w1, w2t, vec128, vec32, mask)
    in_specs = [_full_spec(a.shape) for a in args]

    out_rows = pl.pallas_call(
        transformer_block_kernel,
        out_shape=jax.ShapeDtypeStruct((N, D), jnp.float32),
        grid_spec=pltpu.PrefetchScalarGridSpec(
            num_scalar_prefetch=0,
            grid=(1,),                     # single block / single activation -> one step;
            in_specs=in_specs,             # stack layers on this axis if fusing multiple blocks
            out_specs=_full_spec((N, D)),
        ),
        compiler_params=pltpu.CompilerParams(
            dimension_semantics=("arbitrary",),
        ),
    )(*args)
    return out_rows.reshape(B, S, D)


def _layernorm_ref(x, gamma, beta):
    mu = jnp.mean(x, axis=-1, keepdims=True)
    var = jnp.mean((x - mu) ** 2, axis=-1, keepdims=True)
    return (x - mu) * lax.rsqrt(var + EPS) * gamma + beta


def reference_block(x, params):
    # Pure-JAX reference (matches the PyTorch module) for correctness checking.
    (ln1_g, ln1_b, wq, bq, wk, bk, wv, bv, wo, bo,
     ln2_g, ln2_b, w1, b1, w2, b2) = params
    xn = _layernorm_ref(x, ln1_g, ln1_b)
    heads = []
    for h in range(H):
        q = xn @ wq[h] + bq[h]
        k = xn @ wk[h] + bk[h]
        v = xn @ wv[h] + bv[h]
        a = jnp.einsum("bqd,bkd->bqk", q, k) / math.sqrt(float(DK))
        p = jax.nn.softmax(a, axis=-1)
        heads.append(jnp.einsum("bqk,bkd->bqd", p, v))
    attn = jnp.concatenate(heads, axis=-1) @ wo + bo
    x1 = x + attn
    xn2 = _layernorm_ref(x1, ln2_g, ln2_b)
    h1 = xn2 @ w1 + b1
    h1 = h1 * jax.nn.sigmoid(h1)
    return x1 + (h1 @ w2 + b2)


def init_params(key):
    keys = jax.random.split(key, 12)
    s = 0.1
    ln1_g = jnp.ones((1, D), jnp.float32)
    ln1_b = jnp.zeros((1, D), jnp.float32)
    wq = s * jax.random.normal(keys[0], (H, D, DK), jnp.float32)
    bq = s * jax.random.normal(keys[1], (H, 1, DK), jnp.float32)
    wk = s * jax.random.normal(keys[2], (H, D, DK), jnp.float32)
    bk = s * jax.random.normal(keys[3], (H, 1, DK), jnp.float32)
    wv = s * jax.random.normal(keys[4], (H, D, D), jnp.float32)
    bv = s * jax.random.normal(keys[5], (H, 1, D), jnp.float32)
    wo = s * jax.random.normal(keys[6], (H * D, D), jnp.float32)
    bo = s * jax.random.normal(keys[7], (1, D), jnp.float32)
    ln2_g = jnp.ones((1, D), jnp.float32)
    ln2_b = jnp.zeros((1, D), jnp.float32)
    w1 = s * jax.random.normal(keys[8], (D, FF), jnp.float32)
    b1 = s * jax.random.normal(keys[9], (1, FF), jnp.float32)
    w2 = s * jax.random.normal(keys[10], (FF, D), jnp.float32)
    b2 = s * jax.random.normal(keys[11], (1, D), jnp.float32)
    return (ln1_g, ln1_b, wq, bq, wk, bk, wv, bv, wo, bo,
            ln2_g, ln2_b, w1, b1, w2, b2)


if __name__ == "__main__":
    key = jax.random.PRNGKey(0)
    kx, kp = jax.random.split(key)
    x = jax.random.normal(kx, (B, S, D), jnp.float32)
    params = init_params(kp)

    out = transformer_block(x, params)
    out = jax.block_until_ready(out)

    ref = reference_block(x, params)
    assert out.shape == (B, S, D)
    assert jnp.allclose(out, ref, atol=1e-4, rtol=1e-4), "mismatch vs JAX reference"

    print("KERNEL_OK")
</pallas_src>

<mosaic_0001>
module attributes {stable_mosaic.version = 11 : i64} {
  func.func @transformer_block_kernel(%arg0: i32, %arg1: memref<16x32xf32, #tpu.memory_space<vmem>>, %arg2: memref<32x128xf32, #tpu.memory_space<vmem>>, %arg3: memref<32x128xf32, #tpu.memory_space<vmem>>, %arg4: memref<32x128xf32, #tpu.memory_space<vmem>>, %arg5: memref<2x128xf32, #tpu.memory_space<vmem>>, %arg6: memref<8x32xf32, #tpu.memory_space<vmem>>, %arg7: memref<32x16xf32, #tpu.memory_space<vmem>>, %arg8: memref<16x32xf32, #tpu.memory_space<vmem>>) attributes {dimension_semantics = [#tpu.dimension_semantics<arbitrary>], iteration_bounds = array<i64: 1>, scalar_prefetch = 0 : i64, scratch_operands = 0 : i64, tpu.core_type = #tpu.core_type<tc>, window_params = [{pipeline_mode = #tpu.pipeline_mode<synchronous>, transform_indices = @transform_0, window_bounds = array<i64: 16, 32>}, {pipeline_mode = #tpu.pipeline_mode<synchronous>, transform_indices = @transform_1, window_bounds = array<i64: 32, 128>}, {pipeline_mode = #tpu.pipeline_mode<synchronous>, transform_indices = @transform_2, window_bounds = array<i64: 32, 128>}, {pipeline_mode = #tpu.pipeline_mode<synchronous>, transform_indices = @transform_3, window_bounds = array<i64: 32, 128>}, {pipeline_mode = #tpu.pipeline_mode<synchronous>, transform_indices = @transform_4, window_bounds = array<i64: 2, 128>}, {pipeline_mode = #tpu.pipeline_mode<synchronous>, transform_indices = @transform_5, window_bounds = array<i64: 8, 32>}, {pipeline_mode = #tpu.pipeline_mode<synchronous>, transform_indices = @transform_6, window_bounds = array<i64: 32, 16>}, {pipeline_mode = #tpu.pipeline_mode<synchronous>, transform_indices = @transform_7, window_bounds = array<i64: 16, 32>}]} {
    %c0 = arith.constant 0 : index
    %c0_0 = arith.constant 0 : index
    %0 = vector.load %arg1[%c0, %c0_0] : memref<16x32xf32, #tpu.memory_space<vmem>>, vector<16x32xf32>
    %c0_1 = arith.constant 0 : index
    %c0_2 = arith.constant 0 : index
    %1 = vector.load %arg6[%c0_1, %c0_2] : memref<8x32xf32, #tpu.memory_space<vmem>>, vector<8x32xf32>
    %c0_3 = arith.constant 0 : index
    %c0_4 = arith.constant 0 : index
    %2 = vector.load %arg5[%c0_3, %c0_4] : memref<2x128xf32, #tpu.memory_space<vmem>>, vector<2x128xf32>
    %3 = vector.extract_strided_slice %1 {offsets = [0, 0], sizes = [1, 32], strides = [1, 1]} : vector<8x32xf32> to vector<1x32xf32>
    %4 = vector.extract_strided_slice %1 {offsets = [1, 0], sizes = [1, 32], strides = [1, 1]} : vector<8x32xf32> to vector<1x32xf32>
    %5 = vector.extract_strided_slice %1 {offsets = [2, 0], sizes = [1, 32], strides = [1, 1]} : vector<8x32xf32> to vector<1x32xf32>
    %6 = vector.extract_strided_slice %1 {offsets = [3, 0], sizes = [1, 32], strides = [1, 1]} : vector<8x32xf32> to vector<1x32xf32>
    %7 = vector.extract_strided_slice %1 {offsets = [4, 0], sizes = [1, 32], strides = [1, 1]} : vector<8x32xf32> to vector<1x32xf32>
    %8 = vector.extract_strided_slice %1 {offsets = [5, 0], sizes = [1, 32], strides = [1, 1]} : vector<8x32xf32> to vector<1x32xf32>
    %9 = vector.extract_strided_slice %2 {offsets = [0, 0], sizes = [1, 128], strides = [1, 1]} : vector<2x128xf32> to vector<1x128xf32>
    %10 = vector.extract_strided_slice %2 {offsets = [1, 0], sizes = [1, 128], strides = [1, 1]} : vector<2x128xf32> to vector<1x128xf32>
    %cst = arith.constant dense<0.000000e+00> : vector<16xf32>
    %11 = vector.multi_reduction <add>, %0, %cst [1] : vector<16x32xf32> to vector<16xf32>
    %12 = vector.shape_cast %11 : vector<16xf32> to vector<16x1xf32>
    %cst_5 = arith.constant 3.200000e+01 : f32
    %13 = vector.broadcast %cst_5 : f32 to vector<16x1xf32>
    %14 = arith.divf %12, %13 : vector<16x1xf32>
    %15 = arith.mulf %0, %0 : vector<16x32xf32>
    %cst_6 = arith.constant dense<0.000000e+00> : vector<16xf32>
    %16 = vector.multi_reduction <add>, %15, %cst_6 [1] : vector<16x32xf32> to vector<16xf32>
    %17 = vector.shape_cast %16 : vector<16xf32> to vector<16x1xf32>
    %cst_7 = arith.constant 3.200000e+01 : f32
    %18 = vector.broadcast %cst_7 : f32 to vector<16x1xf32>
    %19 = arith.divf %17, %18 : vector<16x1xf32>
    %20 = arith.mulf %14, %14 : vector<16x1xf32>
    %21 = arith.subf %19, %20 : vector<16x1xf32>
    %cst_8 = arith.constant 9.99999974E-6 : f32
    %22 = vector.broadcast %cst_8 : f32 to vector<16x1xf32>
    %23 = arith.addf %21, %22 : vector<16x1xf32>
    %24 = math.rsqrt %23 : vector<16x1xf32>
    %25 = vector.broadcast %3 : vector<1x32xf32> to vector<16x32xf32>
    %26 = vector.broadcast %24 : vector<16x1xf32> to vector<16x32xf32>
    %27 = arith.mulf %25, %26 : vector<16x32xf32>
    %28 = arith.mulf %0, %27 : vector<16x32xf32>
    %29 = vector.broadcast %14 : vector<16x1xf32> to vector<16x32xf32>
    %30 = arith.mulf %29, %27 : vector<16x32xf32>
    %31 = vector.broadcast %4 : vector<1x32xf32> to vector<16x32xf32>
    %32 = arith.subf %31, %30 : vector<16x32xf32>
    %33 = arith.addf %28, %32 : vector<16x32xf32>
    %c0_9 = arith.constant 0 : index
    %c0_10 = arith.constant 0 : index
    %34 = vector.load %arg2[%c0_9, %c0_10] : memref<32x128xf32, #tpu.memory_space<vmem>>, vector<32x128xf32>
    %cst_11 = arith.constant dense<0.000000e+00> : vector<16x128xf32>
    %35 = tpu.matmul %33, %34, %cst_11 {dimension_numbers = #tpu.dot_dimension_numbers<[1], [0], [0], [1], [0, 0, 1, 1], [], []>} : vector<16x32xf32>, vector<32x128xf32>, vector<16x128xf32> -> vector<16x128xf32>
    %36 = vector.broadcast %9 : vector<1x128xf32> to vector<16x128xf32>
    %37 = arith.addf %35, %36 : vector<16x128xf32>
    %38 = vector.extract_strided_slice %37 {offsets = [0, 0], sizes = [16, 16], strides = [1, 1]} : vector<16x128xf32> to vector<16x16xf32>
    %39 = vector.extract_strided_slice %37 {offsets = [0, 16], sizes = [16, 16], strides = [1, 1]} : vector<16x128xf32> to vector<16x16xf32>
    %40 = vector.extract_strided_slice %37 {offsets = [0, 32], sizes = [16, 16], strides = [1, 1]} : vector<16x128xf32> to vector<16x16xf32>
    %41 = vector.extract_strided_slice %37 {offsets = [0, 48], sizes = [16, 16], strides = [1, 1]} : vector<16x128xf32> to vector<16x16xf32>
    %42 = vector.extract_strided_slice %37 {offsets = [0, 64], sizes = [16, 32], strides = [1, 1]} : vector<16x128xf32> to vector<16x32xf32>
    %43 = vector.extract_strided_slice %37 {offsets = [0, 96], sizes = [16, 32], strides = [1, 1]} : vector<16x128xf32> to vector<16x32xf32>
    %cst_12 = arith.constant dense<0.000000e+00> : vector<16x16xf32>
    %44 = tpu.matmul %38, %40, %cst_12 {dimension_numbers = #tpu.dot_dimension_numbers<[1], [1], [0], [0], [0, 0, 1, 0], [], []>} : vector<16x16xf32>, vector<16x16xf32>, vector<16x16xf32> -> vector<16x16xf32>
    %cst_13 = arith.constant dense<0.000000e+00> : vector<16x16xf32>
    %45 = tpu.matmul %39, %41, %cst_13 {dimension_numbers = #tpu.dot_dimension_numbers<[1], [1], [0], [0], [0, 0, 1, 0], [], []>} : vector<16x16xf32>, vector<16x16xf32>, vector<16x16xf32> -> vector<16x16xf32>
    %46 = tpu.concatenate %44, %45 in 0 : vector<16x16xf32>, vector<16x16xf32> -> vector<32x16xf32>
    %c0_14 = arith.constant 0 : index
    %c0_15 = arith.constant 0 : index
    %47 = vector.load %arg7[%c0_14, %c0_15] : memref<32x16xf32, #tpu.memory_space<vmem>>, vector<32x16xf32>
    %48 = arith.addf %46, %47 : vector<32x16xf32>
    %cst_16 = arith.constant dense<0xFF800000> : vector<32xf32>
    %49 = vector.multi_reduction <maximumf>, %48, %cst_16 [1] : vector<32x16xf32> to vector<32xf32>
    %50 = vector.shape_cast %49 : vector<32xf32> to vector<32x1xf32>
    %51 = vector.broadcast %50 : vector<32x1xf32> to vector<32x16xf32>
    %52 = arith.subf %48, %51 : vector<32x16xf32>
    %53 = math.exp %52 : vector<32x16xf32>
    %cst_17 = arith.constant dense<0.000000e+00> : vector<32xf32>
    %54 = vector.multi_reduction <add>, %53, %cst_17 [1] : vector<32x16xf32> to vector<32xf32>
    %55 = vector.shape_cast %54 : vector<32xf32> to vector<32x1xf32>
    %56 = tpu.reciprocal %55 : vector<32x1xf32> -> vector<32x1xf32>
    %57 = vector.broadcast %56 : vector<32x1xf32> to vector<32x16xf32>
    %58 = arith.mulf %53, %57 : vector<32x16xf32>
    %59 = vector.extract_strided_slice %58 {offsets = [0, 0], sizes = [16, 16], strides = [1, 1]} : vector<32x16xf32> to vector<16x16xf32>
    %cst_18 = arith.constant dense<0.000000e+00> : vector<16x32xf32>
    %60 = tpu.matmul %59, %42, %cst_18 {dimension_numbers = #tpu.dot_dimension_numbers<[1], [0], [0], [1], [0, 0, 1, 1], [], []>} : vector<16x16xf32>, vector<16x32xf32>, vector<16x32xf32> -> vector<16x32xf32>
    %61 = vector.extract_strided_slice %58 {offsets = [16, 0], sizes = [16, 16], strides = [1, 1]} : vector<32x16xf32> to vector<16x16xf32>
    %cst_19 = arith.constant dense<0.000000e+00> : vector<16x32xf32>
    %62 = tpu.matmul %61, %43, %cst_19 {dimension_numbers = #tpu.dot_dimension_numbers<[1], [0], [0], [1], [0, 0, 1, 1], [], []>} : vector<16x16xf32>, vector<16x32xf32>, vector<16x32xf32> -> vector<16x32xf32>
    %63 = arith.addf %60, %62 : vector<16x32xf32>
    %64 = vector.broadcast %7 : vector<1x32xf32> to vector<16x32xf32>
    %65 = arith.addf %63, %64 : vector<16x32xf32>
    %66 = arith.addf %0, %65 : vector<16x32xf32>
    %cst_20 = arith.constant dense<0.000000e+00> : vector<16xf32>
    %67 = vector.multi_reduction <add>, %66, %cst_20 [1] : vector<16x32xf32> to vector<16xf32>
    %68 = vector.shape_cast %67 : vector<16xf32> to vector<16x1xf32>
    %cst_21 = arith.constant 3.200000e+01 : f32
    %69 = vector.broadcast %cst_21 : f32 to vector<16x1xf32>
    %70 = arith.divf %68, %69 : vector<16x1xf32>
    %71 = arith.mulf %66, %66 : vector<16x32xf32>
    %cst_22 = arith.constant dense<0.000000e+00> : vector<16xf32>
    %72 = vector.multi_reduction <add>, %71, %cst_22 [1] : vector<16x32xf32> to vector<16xf32>
    %73 = vector.shape_cast %72 : vector<16xf32> to vector<16x1xf32>
    %cst_23 = arith.constant 3.200000e+01 : f32
    %74 = vector.broadcast %cst_23 : f32 to vector<16x1xf32>
    %75 = arith.divf %73, %74 : vector<16x1xf32>
    %76 = arith.mulf %70, %70 : vector<16x1xf32>
    %77 = arith.subf %75, %76 : vector<16x1xf32>
    %cst_24 = arith.constant 9.99999974E-6 : f32
    %78 = vector.broadcast %cst_24 : f32 to vector<16x1xf32>
    %79 = arith.addf %77, %78 : vector<16x1xf32>
    %80 = math.rsqrt %79 : vector<16x1xf32>
    %81 = vector.broadcast %5 : vector<1x32xf32> to vector<16x32xf32>
    %82 = vector.broadcast %80 : vector<16x1xf32> to vector<16x32xf32>
    %83 = arith.mulf %81, %82 : vector<16x32xf32>
    %84 = arith.mulf %66, %83 : vector<16x32xf32>
    %85 = vector.broadcast %70 : vector<16x1xf32> to vector<16x32xf32>
    %86 = arith.mulf %85, %83 : vector<16x32xf32>
    %87 = vector.broadcast %6 : vector<1x32xf32> to vector<16x32xf32>
    %88 = arith.subf %87, %86 : vector<16x32xf32>
    %89 = arith.addf %84, %88 : vector<16x32xf32>
    %c0_25 = arith.constant 0 : index
    %c0_26 = arith.constant 0 : index
    %90 = vector.load %arg3[%c0_25, %c0_26] : memref<32x128xf32, #tpu.memory_space<vmem>>, vector<32x128xf32>
    %cst_27 = arith.constant dense<0.000000e+00> : vector<16x128xf32>
    %91 = tpu.matmul %89, %90, %cst_27 {dimension_numbers = #tpu.dot_dimension_numbers<[1], [0], [0], [1], [0, 0, 1, 1], [], []>} : vector<16x32xf32>, vector<32x128xf32>, vector<16x128xf32> -> vector<16x128xf32>
    %92 = vector.broadcast %10 : vector<1x128xf32> to vector<16x128xf32>
    %93 = arith.addf %91, %92 : vector<16x128xf32>
    %94 = arith.negf %93 : vector<16x128xf32>
    %95 = math.exp %94 : vector<16x128xf32>
    %cst_28 = arith.constant 1.000000e+00 : f32
    %96 = vector.broadcast %cst_28 : f32 to vector<16x128xf32>
    %97 = arith.addf %96, %95 : vector<16x128xf32>
    %98 = arith.divf %96, %97 : vector<16x128xf32>
    %99 = arith.mulf %93, %98 : vector<16x128xf32>
    %c0_29 = arith.constant 0 : index
    %c0_30 = arith.constant 0 : index
    %100 = vector.load %arg4[%c0_29, %c0_30] : memref<32x128xf32, #tpu.memory_space<vmem>>, vector<32x128xf32>
    %cst_31 = arith.constant dense<0.000000e+00> : vector<16x32xf32>
    %101 = tpu.matmul %99, %100, %cst_31 {dimension_numbers = #tpu.dot_dimension_numbers<[1], [1], [0], [0], [0, 0, 1, 0], [], []>} : vector<16x128xf32>, vector<32x128xf32>, vector<16x32xf32> -> vector<16x32xf32>
    %102 = vector.broadcast %8 : vector<1x32xf32> to vector<16x32xf32>
    %103 = arith.addf %101, %102 : vector<16x32xf32>
    %104 = arith.addf %66, %103 : vector<16x32xf32>
    %c0_32 = arith.constant 0 : index
    %c0_33 = arith.constant 0 : index
    %105 = vector.load %arg8[%c0_32, %c0_33] : memref<16x32xf32, #tpu.memory_space<vmem>>, vector<16x32xf32>
    tpu.vector_store %arg8[%c0_32, %c0_33], %104 {strides = array<i32>} : memref<16x32xf32, #tpu.memory_space<vmem>>, vector<16x32xf32>,
    return
  }
  func.func @transform_0(%arg0: i32) -> (i32, i32) {
    %c0_i32 = arith.constant 0 : i32
    %c0_i32_0 = arith.constant 0 : i32
    %c0_i32_1 = arith.constant 0 : i32
    return %c0_i32, %c0_i32_0 : i32, i32
  }
  func.func @transform_1(%arg0: i32) -> (i32, i32) {
    %c0_i32 = arith.constant 0 : i32
    %c0_i32_0 = arith.constant 0 : i32
    %c0_i32_1 = arith.constant 0 : i32
    return %c0_i32, %c0_i32_0 : i32, i32
  }
  func.func @transform_2(%arg0: i32) -> (i32, i32) {
    %c0_i32 = arith.constant 0 : i32
    %c0_i32_0 = arith.constant 0 : i32
    %c0_i32_1 = arith.constant 0 : i32
    return %c0_i32, %c0_i32_0 : i32, i32
  }
  func.func @transform_3(%arg0: i32) -> (i32, i32) {
    %c0_i32 = arith.constant 0 : i32
    %c0_i32_0 = arith.constant 0 : i32
    %c0_i32_1 = arith.constant 0 : i32
    return %c0_i32, %c0_i32_0 : i32, i32
  }
  func.func @transform_4(%arg0: i32) -> (i32, i32) {
    %c0_i32 = arith.constant 0 : i32
    %c0_i32_0 = arith.constant 0 : i32
    %c0_i32_1 = arith.constant 0 : i32
    return %c0_i32, %c0_i32_0 : i32, i32
  }
  func.func @transform_5(%arg0: i32) -> (i32, i32) {
    %c0_i32 = arith.constant 0 : i32
    %c0_i32_0 = arith.constant 0 : i32
    %c0_i32_1 = arith.constant 0 : i32
    return %c0_i32, %c0_i32_0 : i32, i32
  }
  func.func @transform_6(%arg0: i32) -> (i32, i32) {
    %c0_i32 = arith.constant 0 : i32
    %c0_i32_0 = arith.constant 0 : i32
    %c0_i32_1 = arith.constant 0 : i32
    return %c0_i32, %c0_i32_0 : i32, i32
  }
  func.func @transform_7(%arg0: i32) -> (i32, i32) {
    %c0_i32 = arith.constant 0 : i32
    %c0_i32_0 = arith.constant 0 : i32
    %c0_i32_1 = arith.constant 0 : i32
    return %c0_i32, %c0_i32_0 : i32, i32
  }
}

</mosaic_0001>

<llo_original>
// kernel: tpu_custom_call.1
$region0: #{tpu_custom_call.1}
  #allocation0 [shape = 'u32[]', space=smem, size = 0x4, offset = 0x4, fixed_abs, tag = 'smem constant byte address 0x4 - core index']
  #allocation1 [shape = 'u32[144,128]{1,0:T(1,128)}', space=vmem, size = 0x12000, scoped, tag = 'internal scratch']
  %s0 = inlined_call_operand.vmem [shape: f32[16,32], index: 0, kind: input, shape index: {}]
  %s1 = inlined_call_operand.vmem [shape: f32[32,128], index: 1, kind: input, shape index: {}]
  %s2 = inlined_call_operand.hbm [shape: f32[32,128], index: 2, kind: input, shape index: {}]
  %s3 = inlined_call_operand.hbm [shape: f32[32,128], index: 3, kind: input, shape index: {}]
  %s4 = inlined_call_operand.vmem [shape: f32[2,128], index: 4, kind: input, shape index: {}]
  %s5 = inlined_call_operand.hbm [shape: f32[8,32], index: 5, kind: input, shape index: {}]
  %s6 = inlined_call_operand.vmem [shape: f32[32,16], index: 6, kind: input, shape index: {}]
  %s7 = inlined_call_operand.hbm [shape: f32[16,32], index: 7, kind: output, shape index: {}]
  %s8 = sld [smem:[#allocation0]]
  $region50: #{tpu_custom_call.1} parent=0
    _
  %s10 = ssub.s32 1, %s8
  %s11 = scalar_select 0, %s10, %s8
  $region1: #{tpu_custom_call.1} parent=0
    #allocation2 [shape = 'u8[16384]{0}', space=vmem, size = 0x4000, scoped, tag = 'input window, operand 2, single buffered']
    #allocation3 [shape = 's32[1]{0}', space=sflag, size = 0x4, scoped, tag = 'scoped memory for tpu_custom_call.1']
    #allocation4 [shape = 's32[1]{0}', space=sflag, size = 0x4, scoped, tag = 'scoped memory for tpu_custom_call.1']
    #allocation5 [shape = 'u8[16384]{0}', space=vmem, size = 0x4000, scoped, tag = 'input window, operand 3, single buffered']
    #allocation6 [shape = 's32[1]{0}', space=sflag, size = 0x4, scoped, tag = 'scoped memory for tpu_custom_call.1']
    #allocation7 [shape = 'u8[4096]{0}', space=vmem, size = 0x1000, scoped, tag = 'input window, operand 5, single buffered']
    #allocation8 [shape = 'u8[8192]{0}', space=vmem, size = 0x2000, scoped, tag = 'output window, operand 0, single buffered']
    %12 = vsyncpa [#allocation3], 0
    %13 = vsyncpa [#allocation6], 0
    %14 = vsyncpa [#allocation4], 0
    // Predicated region
    $region2: #{tpu_custom_call.1} parent=1 // pred_check
      _
    $region3: #{tpu_custom_call.1} parent=1 // pred_check_branch
      %16 = sbr.rel (0) target = $region5
    $region4: #{tpu_custom_call.1} parent=1 // pred_region
      _
    $region5: #{tpu_custom_call.1} parent=1 // pred_fallthru
      _
    // Predicated region
    $region6: #{tpu_custom_call.1} parent=1 // pred_check
      _
    $region7: #{tpu_custom_call.1} parent=1 // pred_check_branch
      %18 = sbr.rel (0) target = $region9
    $region8: #{tpu_custom_call.1} parent=1 // pred_region
      _
    $region9: #{tpu_custom_call.1} parent=1 // pred_fallthru
      _
    // Predicated region
    $region10: #{tpu_custom_call.1} parent=1 // pred_check
      _
    $region11: #{tpu_custom_call.1} parent=1 // pred_check_branch
      %20 = sbr.rel (0) target = $region13
    $region12: #{tpu_custom_call.1} parent=1 // pred_region
      %s22 = ssub.s32 512, 512
      %23 = vsyncadd [#allocation3], %s22
      %s24 = sshll.u32 [#allocation2], 4
      %s25 = int_to_ptr.vmem [resolvable:$true] %s24
      %30 = dma.hbm_to_vmem [thread:$0]  %s2, 512, %s25, [#allocation3], 128, 128, 8
    $region13: #{tpu_custom_call.1} parent=1 // pred_fallthru
      _
    // Predicated region
    $region14: #{tpu_custom_call.1} parent=1 // pred_check
      _
    $region15: #{tpu_custom_call.1} parent=1 // pred_check_branch
      %32 = sbr.rel (0) target = $region17
    $region16: #{tpu_custom_call.1} parent=1 // pred_region
      %s34 = ssub.s32 512, 512
      %35 = vsyncadd [#allocation6], %s34
      %s36 = sshll.u32 [#allocation5], 4
      %s37 = int_to_ptr.vmem [resolvable:$true] %s36
      %42 = dma.hbm_to_vmem [thread:$0]  %s3, 512, %s37, [#allocation6], 128, 128, 8
    $region17: #{tpu_custom_call.1} parent=1 // pred_fallthru
      _
    // Predicated region
    $region18: #{tpu_custom_call.1} parent=1 // pred_check
      _
    $region19: #{tpu_custom_call.1} parent=1 // pred_check_branch
      %44 = sbr.rel (0) target = $region21
    $region20: #{tpu_custom_call.1} parent=1 // pred_region
      _
    $region21: #{tpu_custom_call.1} parent=1 // pred_fallthru
      _
    // Predicated region
    $region22: #{tpu_custom_call.1} parent=1 // pred_check
      _
    $region23: #{tpu_custom_call.1} parent=1 // pred_check_branch
      %46 = sbr.rel (0) target = $region25
    $region24: #{tpu_custom_call.1} parent=1 // pred_region
      %s48 = ssub.s32 128, 128
      %49 = vsyncadd [#allocation6], %s48
      %s51 = sshll.u32 [#allocation7], 4
      %s52 = int_to_ptr.vmem [resolvable:$true] %s51
      %54 = dma.hbm_to_vmem [thread:$0]  %s5, 128, %s52, [#allocation6]
    $region25: #{tpu_custom_call.1} parent=1 // pred_fallthru
      _
    // Predicated region
    $region26: #{tpu_custom_call.1} parent=1 // pred_check
      _
    $region27: #{tpu_custom_call.1} parent=1 // pred_check_branch
      %56 = sbr.rel (0) target = $region29
    $region28: #{tpu_custom_call.1} parent=1 // pred_region
      _
    $region29: #{tpu_custom_call.1} parent=1 // pred_fallthru
      _
    // Predicated region
    $region30: #{tpu_custom_call.1} parent=1 // pred_check
      _
    $region31: #{tpu_custom_call.1} parent=1 // pred_check_branch
      %58 = sbr.rel (0) target = $region33
    $region32: #{tpu_custom_call.1} parent=1 // pred_region
      %59 = dma.done [#allocation3], 512
    $region33: #{tpu_custom_call.1} parent=1 // pred_fallthru
      _
    // Predicated region
    $region34: #{tpu_custom_call.1} parent=1 // pred_check
      _
    $region35: #{tpu_custom_call.1} parent=1 // pred_check_branch
      %61 = sbr.rel (0) target = $region37
    $region36: #{tpu_custom_call.1} parent=1 // pred_region
      %62 = dma.done [#allocation6], 512
    $region37: #{tpu_custom_call.1} parent=1 // pred_fallthru
      _
    // Predicated region
    $region38: #{tpu_custom_call.1} parent=1 // pred_check
      _
    $region39: #{tpu_custom_call.1} parent=1 // pred_check_branch
      %64 = sbr.rel (0) target = $region41
    $region40: #{tpu_custom_call.1} parent=1 // pred_region
      %65 = dma.done [#allocation6], 128
    $region41: #{tpu_custom_call.1} parent=1 // pred_fallthru
      _
    %v66 = vld [vmem:[%s0] sm:$0xff]
    %v67 = vld [vmem:[%s0 + $0x8] sm:$0xff]
    %v68 = vld [vmem:[#allocation7] sm:$0xff]
    %v69 = vld [vmem:[%s4] sm:$0x3]
    %vm70 = vcmask 261120
    %v71 = vsel %vm70, %v66, 0.0
    %72 = vadd.xlane.f32.xlu0 %v71
    %v73 = vpop.xlane.xlu0 %72
    %v74 = vsel %vm70, %v67, 0.0
    %75 = vadd.xlane.f32.xlu0 %v74
    %v76 = vpop.xlane.xlu0 %75
    %v77 = vrcp.pop 32.0
    %v78 = vmul.f32 %v73, %v77
    %v79 = vmul.f32 %v76, %v77
    %v80 = vmul.f32 %v66, %v66
    %v81 = vmul.f32 %v67, %v67
    %v82 = vsel %vm70, %v80, 0.0
    %83 = vadd.xlane.f32.xlu0 %v82
    %v84 = vpop.xlane.xlu0 %83
    %v85 = vsel %vm70, %v81, 0.0
    %86 = vadd.xlane.f32.xlu0 %v85
    %v87 = vpop.xlane.xlu0 %86
    %v88 = vmul.f32 %v84, %v77
    %v89 = vmul.f32 %v87, %v77
    %v90 = vmul.f32 %v78, %v78
    %v91 = vmul.f32 %v79, %v79
    %v92 = vsub.f32 %v88, %v90
    %v93 = vsub.f32 %v89, %v91
    %v94 = vadd.f32 %v92, 1e-05
    %v95 = vadd.f32 %v93, 1e-05
    %v96 = vrsqrt.pop %v94
    %v97 = vrsqrt.pop %v95
    %v98 = vlaneseq
    %v99 = vshrl.u32 %v98, 7
    %v100 = vsub.s32 0, %v99
    %v101 = vrot.slane %v68, %v100
    %v102 = vmul.f32 %v101, %v96
    %v103 = vmul.f32 %v101, %v97
    %v104 = vmul.f32 %v66, %v102
    %v105 = vmul.f32 %v67, %v103
    %v106 = vmul.f32 %v78, %v102
    %v107 = vmul.f32 %v79, %v103
    %v108 = vlaneseq
    %v109 = vshrl.u32 %v108, 7
    %v110 = vsub.s32 1, %v109
    %v111 = vrot.slane %v68, %v110
    %v112 = vsub.f32 %v111, %v106
    %v113 = vsub.f32 %v111, %v107
    %v114 = vadd.f32 %v104, %v112
    %v115 = vadd.f32 %v105, %v113
    %v116 = vld [vmem:[%s1] sm:$0xff]
    %v117 = vld [vmem:[%s1 + $0x8] sm:$0xff]
    %v118 = vld [vmem:[%s1 + $0x10] sm:$0xff]
    %v119 = vld [vmem:[%s1 + $0x18] sm:$0xff]
    %v120 = vlaneseq
    %v121 = vshrl.u32 %v120, 7
    %v122 = vsub.s32 0, %v121
    %v123 = vrot.slane %v69, %v122
    %v125 = vsel %vm70, %v114, 0
    %v128 = vsel %vm70, %v115, 0
    %130 = vmatprep.subr.mxu0 0.0
    %131 = vmatpush1.msra.mxu0 %v116
    %132 = vmatprep.subr.mxu0 0.0
    %133 = vmatpush1.msra.mxu0 %v117
    %134 = vmatprep.subr.mxu0 0.0
    %135 = vmatpush1.msra.mxu0 %v118
    %136 = vmatprep.subr.mxu0 0.0
    %137 = vmatpush1.msra.mxu0 %v119
    %138 = vmatprep.subr.mxu0 0.0
    %139 = vmatpush1.msra.mxu0 0.0
    %140 = vmatprep.subr.mxu0 0.0
    %141 = vmatpush1.msra.mxu0 0.0
    %142 = vmatprep.subr.mxu0 0.0
    %143 = vmatpush1.msra.mxu0 0.0
    %144 = vmatprep.subr.mxu0 0.0
    %145 = vmatpush1.msra.mxu0 0.0
    %146 = vmatprep.subr.mxu0 0.0
    %147 = vmatpush1.msra.mxu0 0.0
    %148 = vmatprep.subr.mxu0 0.0
    %149 = vmatpush1.msra.mxu0 0.0
    %150 = vmatprep.subr.mxu0 0.0
    %151 = vmatpush1.msra.mxu0 0.0
    %152 = vmatprep.subr.mxu0 0.0
    %153 = vmatpush1.msra.mxu0 0.0
    %154 = vmatprep.subr.mxu0 0.0
    %155 = vmatpush1.msra.mxu0 0.0
    %156 = vmatprep.subr.mxu0 0.0
    %157 = vmatpush1.msra.mxu0 0.0
    %158 = vmatprep.subr.mxu0 0.0
    %159 = vmatpush1.msra.mxu0 0.0
    %160 = vmatprep.subr.mxu0 0.0
    %161 = vmatpush1.msra.mxu0 0.0
    %162 = vmatprep.subr.mxu0 0.0
    %163 = vmatpush1.msra.mxu0 0.0
    %164 = vmatprep.subr.mxu0 0.0
    %165 = vmatpush1.msra.mxu0 0.0
    %166 = vmatprep.subr.mxu0 0.0
    %167 = vmatpush1.msra.mxu0 0.0
    %168 = vmatprep.subr.mxu0 0.0
    %169 = vmatpush1.msra.mxu0 0.0
    %170 = vmatprep.subr.mxu0 0.0
    %171 = vmatpush1.msra.mxu0 0.0
    %172 = vmatprep.subr.mxu0 0.0
    %173 = vmatpush1.msra.mxu0 0.0
    %174 = vmatprep.subr.mxu0 0.0
    %175 = vmatpush1.msra.mxu0 0.0
    %176 = vmatprep.subr.mxu0 0.0
    %177 = vmatpush1.msra.mxu0 0.0
    %178 = vmatprep.subr.mxu0 0.0
    %179 = vmatpush1.msra.mxu0 0.0
    %180 = vmatprep.subr.mxu0 0.0
    %181 = vmatpush1.msra.mxu0 0.0
    %182 = vmatprep.subr.mxu0 0.0
    %183 = vmatpush1.msra.mxu0 0.0
    %184 = vmatprep.subr.mxu0 0.0
    %185 = vmatpush1.msra.mxu0 0.0
    %186 = vmatprep.subr.mxu0 0.0
    %187 = vmatpush1.msra.mxu0 0.0
    %188 = vmatprep.subr.mxu0 0.0
    %189 = vmatpush1.msra.mxu0 0.0
    %190 = vmatprep.subr.mxu0 0.0
    %191 = vmatpush1.msra.mxu0 0.0
    %192 = vmatprep.subr.mxu0 0.0
    %193 = vmatpush1.msra.mxu0 0.0
    %194 = vmatprep.mubr.f32.mxu0 0.0
    %195 = vmatmul.mubr.f32.gmra.mrb[0].mxu0 %v125
    %v196 = vpop.f32.mrb[0].mxu0
    %v197 = vadd.f32 %v123, %v196
    %v198 = vpop.f32.mrb[0].mxu0
    %199 = vmatprep.mubr.f32.mxu0 0.0
    %200 = vmatmul.mubr.f32.gmra.mrb[0].mxu0 %v128
    %v201 = vpop.f32.mrb[0].mxu0
    %v202 = vadd.f32 %v123, %v201
    %v203 = vpop.f32.mrb[0].mxu0
    %204 = vdwg.mxu0
    %207 = vrot.lane.b32.xlu0 %v197, 96
    %v208 = vpop.permute.xlu0 %207
    %209 = vrot.lane.b32.xlu0 %v202, 96
    %v210 = vpop.permute.xlu0 %209
    %vm211 = vcmask 130048
    %v212 = vsel %vm211, %v197, 0
    %v214 = vsel %vm211, %v202, 0
    %v216 = vsel %vm211, %v208, 0
    %v218 = vsel %vm211, %v210, 0
    %220 = vmatprep.subr.mxu0 0.0
    %221 = vmatpush1.xpose.msra.mxu0 %v216
    %222 = vmatprep.subr.mxu0 0.0
    %223 = vmatpush1.xpose.msra.mxu0 %v218
    %224 = vmatprep.subr.mxu0 0.0
    %225 = vmatpush1.xpose.msra.mxu0 0.0
    %226 = vmatprep.subr.mxu0 0.0
    %227 = vmatpush1.xpose.msra.mxu0 0.0
    %228 = vmatprep.subr.mxu0 0.0
    %229 = vmatpush1.xpose.msra.mxu0 0.0
    %230 = vmatprep.subr.mxu0 0.0
    %231 = vmatpush1.xpose.msra.mxu0 0.0
    %232 = vmatprep.subr.mxu0 0.0
    %233 = vmatpush1.xpose.msra.mxu0 0.0
    %234 = vmatprep.subr.mxu0 0.0
    %235 = vmatpush1.xpose.msra.mxu0 0.0
    %236 = vmatprep.subr.mxu0 0.0
    %237 = vmatpush1.xpose.msra.mxu0 0.0
    %238 = vmatprep.subr.mxu0 0.0
    %239 = vmatpush1.xpose.msra.mxu0 0.0
    %240 = vmatprep.subr.mxu0 0.0
    %241 = vmatpush1.xpose.msra.mxu0 0.0
    %242 = vmatprep.subr.mxu0 0.0
    %243 = vmatpush1.xpose.msra.mxu0 0.0
    %244 = vmatprep.subr.mxu0 0.0
    %245 = vmatpush1.xpose.msra.mxu0 0.0
    %246 = vmatprep.subr.mxu0 0.0
    %247 = vmatpush1.xpose.msra.mxu0 0.0
    %248 = vmatprep.subr.mxu0 0.0
    %249 = vmatpush1.xpose.msra.mxu0 0.0
    %250 = vmatprep.subr.mxu0 0.0
    %251 = vmatpush1.xpose.msra.mxu0 0.0
    %252 = vmatprep.subr.mxu0 0.0
    %253 = vmatpush1.xpose.msra.mxu0 0.0
    %254 = vmatprep.subr.mxu0 0.0
    %255 = vmatpush1.xpose.msra.mxu0 0.0
    %256 = vmatprep.subr.mxu0 0.0
    %257 = vmatpush1.xpose.msra.mxu0 0.0
    %258 = vmatprep.subr.mxu0 0.0
    %259 = vmatpush1.xpose.msra.mxu0 0.0
    %260 = vmatprep.subr.mxu0 0.0
    %261 = vmatpush1.xpose.msra.mxu0 0.0
    %262 = vmatprep.subr.mxu0 0.0
    %263 = vmatpush1.xpose.msra.mxu0 0.0
    %264 = vmatprep.subr.mxu0 0.0
    %265 = vmatpush1.xpose.msra.mxu0 0.0
    %266 = vmatprep.subr.mxu0 0.0
    %267 = vmatpush1.xpose.msra.mxu0 0.0
    %268 = vmatprep.subr.mxu0 0.0
    %269 = vmatpush1.xpose.msra.mxu0 0.0
    %270 = vmatprep.subr.mxu0 0.0
    %271 = vmatpush1.xpose.msra.mxu0 0.0
    %272 = vmatprep.subr.mxu0 0.0
    %273 = vmatpush1.xpose.msra.mxu0 0.0
    %274 = vmatprep.subr.mxu0 0.0
    %275 = vmatpush1.xpose.msra.mxu0 0.0
    %276 = vmatprep.subr.mxu0 0.0
    %277 = vmatpush1.xpose.msra.mxu0 0.0
    %278 = vmatprep.subr.mxu0 0.0
    %279 = vmatpush1.xpose.msra.mxu0 0.0
    %280 = vmatprep.subr.mxu0 0.0
    %281 = vmatpush1.xpose.msra.mxu0 0.0
    %282 = vmatprep.subr.mxu0 0.0
    %283 = vmatpush1.xpose.msra.mxu0 0.0
    %284 = vmatprep.mubr.f32.mxu0 0.0
    %285 = vmatmul.mubr.f32.gmra.mrb[0].mxu0 %v212
    %v286 = vpop.f32.mrb[0].mxu0
    %v287 = vadd.f32 0.0, %v286
    %v288 = vpop.f32.mrb[0].mxu0
    %289 = vmatprep.mubr.f32.mxu0 0.0
    %290 = vmatmul.mubr.f32.gmra.mrb[0].mxu0 %v214
    %v291 = vpop.f32.mrb[0].mxu0
    %v292 = vadd.f32 0.0, %v291
    %v293 = vpop.f32.mrb[0].mxu0
    %294 = vdwg.mxu0
    %295 = vrot.lane.b32.xlu0 %v197, 112
    %v296 = vpop.permute.xlu0 %295
    %297 = vrot.lane.b32.xlu0 %v202, 112
    %v298 = vpop.permute.xlu0 %297
    %299 = vrot.lane.b32.xlu0 %v197, 80
    %v300 = vpop.permute.xlu0 %299
    %301 = vrot.lane.b32.xlu0 %v202, 80
    %v302 = vpop.permute.xlu0 %301
    %v303 = vsel %vm211, %v296, 0
    %v305 = vsel %vm211, %v298, 0
    %v307 = vsel %vm211, %v300, 0
    %v309 = vsel %vm211, %v302, 0
    %311 = vmatprep.subr.mxu0 0.0
    %312 = vmatpush1.xpose.msra.mxu0 %v307
    %313 = vmatprep.subr.mxu0 0.0
    %314 = vmatpush1.xpose.msra.mxu0 %v309
    %315 = vmatprep.subr.mxu0 0.0
    %316 = vmatpush1.xpose.msra.mxu0 0.0
    %317 = vmatprep.subr.mxu0 0.0
    %318 = vmatpush1.xpose.msra.mxu0 0.0
    %319 = vmatprep.subr.mxu0 0.0
    %320 = vmatpush1.xpose.msra.mxu0 0.0
    %321 = vmatprep.subr.mxu0 0.0
    %322 = vmatpush1.xpose.msra.mxu0 0.0
    %323 = vmatprep.subr.mxu0 0.0
    %324 = vmatpush1.xpose.msra.mxu0 0.0
    %325 = vmatprep.subr.mxu0 0.0
    %326 = vmatpush1.xpose.msra.mxu0 0.0
    %327 = vmatprep.subr.mxu0 0.0
    %328 = vmatpush1.xpose.msra.mxu0 0.0
    %329 = vmatprep.subr.mxu0 0.0
    %330 = vmatpush1.xpose.msra.mxu0 0.0
    %331 = vmatprep.subr.mxu0 0.0
    %332 = vmatpush1.xpose.msra.mxu0 0.0
    %333 = vmatprep.subr.mxu0 0.0
    %334 = vmatpush1.xpose.msra.mxu0 0.0
    %335 = vmatprep.subr.mxu0 0.0
    %336 = vmatpush1.xpose.msra.mxu0 0.0
    %337 = vmatprep.subr.mxu0 0.0
    %338 = vmatpush1.xpose.msra.mxu0 0.0
    %339 = vmatprep.subr.mxu0 0.0
    %340 = vmatpush1.xpose.msra.mxu0 0.0
    %341 = vmatprep.subr.mxu0 0.0
    %342 = vmatpush1.xpose.msra.mxu0 0.0
    %343 = vmatprep.subr.mxu0 0.0
    %344 = vmatpush1.xpose.msra.mxu0 0.0
    %345 = vmatprep.subr.mxu0 0.0
    %346 = vmatpush1.xpose.msra.mxu0 0.0
    %347 = vmatprep.subr.mxu0 0.0
    %348 = vmatpush1.xpose.msra.mxu0 0.0
    %349 = vmatprep.subr.mxu0 0.0
    %350 = vmatpush1.xpose.msra.mxu0 0.0
    %351 = vmatprep.subr.mxu0 0.0
    %352 = vmatpush1.xpose.msra.mxu0 0.0
    %353 = vmatprep.subr.mxu0 0.0
    %354 = vmatpush1.xpose.msra.mxu0 0.0
    %355 = vmatprep.subr.mxu0 0.0
    %356 = vmatpush1.xpose.msra.mxu0 0.0
    %357 = vmatprep.subr.mxu0 0.0
    %358 = vmatpush1.xpose.msra.mxu0 0.0
    %359 = vmatprep.subr.mxu0 0.0
    %360 = vmatpush1.xpose.msra.mxu0 0.0
    %361 = vmatprep.subr.mxu0 0.0
    %362 = vmatpush1.xpose.msra.mxu0 0.0
    %363 = vmatprep.subr.mxu0 0.0
    %364 = vmatpush1.xpose.msra.mxu0 0.0
    %365 = vmatprep.subr.mxu0 0.0
    %366 = vmatpush1.xpose.msra.mxu0 0.0
    %367 = vmatprep.subr.mxu0 0.0
    %368 = vmatpush1.xpose.msra.mxu0 0.0
    %369 = vmatprep.subr.mxu0 0.0
    %370 = vmatpush1.xpose.msra.mxu0 0.0
    %371 = vmatprep.subr.mxu0 0.0
    %372 = vmatpush1.xpose.msra.mxu0 0.0
    %373 = vmatprep.subr.mxu0 0.0
    %374 = vmatpush1.xpose.msra.mxu0 0.0
    %375 = vmatprep.mubr.f32.mxu0 0.0
    %376 = vmatmul.mubr.f32.gmra.mrb[0].mxu0 %v303
    %v377 = vpop.f32.mrb[0].mxu0
    %v378 = vadd.f32 0.0, %v377
    %v379 = vpop.f32.mrb[0].mxu0
    %380 = vmatprep.mubr.f32.mxu0 0.0
    %381 = vmatmul.mubr.f32.gmra.mrb[0].mxu0 %v305
    %v382 = vpop.f32.mrb[0].mxu0
    %v383 = vadd.f32 0.0, %v382
    %v384 = vpop.f32.mrb[0].mxu0
    %385 = vdwg.mxu0
    %v386 = vld [vmem:[%s6] sm:$0xff]
    %v387 = vld [vmem:[%s6 + $0x8] sm:$0xff]
    %v388 = vld [vmem:[%s6 + $0x10] sm:$0xff]
    %v389 = vld [vmem:[%s6 + $0x18] sm:$0xff]
    %v390 = vadd.f32 %v287, %v386
    %v391 = vadd.f32 %v292, %v387
    %v392 = vadd.f32 %v378, %v388
    %v393 = vadd.f32 %v383, %v389
    %v394 = vsel %vm211, %v390, -inf
    %395 = vmax.xlane.f32.xlu0 %v394
    %v396 = vpop.xlane.xlu0 %395
    %v397 = vsel %vm211, %v391, -inf
    %398 = vmax.xlane.f32.xlu0 %v397
    %v399 = vpop.xlane.xlu0 %398
    %v400 = vsel %vm211, %v392, -inf
    %401 = vmax.xlane.f32.xlu0 %v400
    %v402 = vpop.xlane.xlu0 %401
    %v403 = vsel %vm211, %v393, -inf
    %404 = vmax.xlane.f32.xlu0 %v403
    %v405 = vpop.xlane.xlu0 %404
    %v406 = vsub.f32 %v390, %v396
    %v407 = vsub.f32 %v391, %v399
    %v408 = vsub.f32 %v392, %v402
    %v409 = vsub.f32 %v393, %v405
    %v410 = vmul.f32 %v406, 1.442695
    %v411 = vpow.pop %v410
    %v412 = vmul.f32 %v407, 1.442695
    %v413 = vpow.pop %v412
    %v414 = vmul.f32 %v408, 1.442695
    %v415 = vpow.pop %v414
    %v416 = vmul.f32 %v409, 1.442695
    %v417 = vpow.pop %v416
    %v418 = vsel %vm211, %v411, 0.0
    %419 = vadd.xlane.f32.xlu0 %v418
    %v420 = vpop.xlane.xlu0 %419
    %v421 = vsel %vm211, %v413, 0.0
    %422 = vadd.xlane.f32.xlu0 %v421
    %v423 = vpop.xlane.xlu0 %422
    %v424 = vsel %vm211, %v415, 0.0
    %425 = vadd.xlane.f32.xlu0 %v424
    %v426 = vpop.xlane.xlu0 %425
    %v427 = vsel %vm211, %v417, 0.0
    %428 = vadd.xlane.f32.xlu0 %v427
    %v429 = vpop.xlane.xlu0 %428
    %v430 = vrcp.pop %v420
    %v431 = vrcp.pop %v423
    %v432 = vrcp.pop %v426
    %v433 = vrcp.pop %v429
    %v434 = vmul.f32 %v411, %v430
    %v435 = vmul.f32 %v413, %v431
    %v436 = vmul.f32 %v415, %v432
    %v437 = vmul.f32 %v417, %v433
    %438 = vrot.lane.b32.xlu0 %v197, 32
    %v439 = vpop.permute.xlu0 %438
    %440 = vrot.lane.b32.xlu0 %v202, 32
    %v441 = vpop.permute.xlu0 %440
    %v445 = vsel %vm211, %v436, 0
    %v448 = vsel %vm211, %v437, 0
    %450 = vmatprep.subr.mxu0 0.0
    %451 = vmatpush1.msra.mxu0 %v439
    %452 = vmatprep.subr.mxu0 0.0
    %453 = vmatpush1.msra.mxu0 %v441
    %454 = vmatprep.subr.mxu0 0.0
    %455 = vmatpush1.msra.mxu0 0.0
    %456 = vmatprep.subr.mxu0 0.0
    %457 = vmatpush1.msra.mxu0 0.0
    %458 = vmatprep.subr.mxu0 0.0
    %459 = vmatpush1.msra.mxu0 0.0
    %460 = vmatprep.subr.mxu0 0.0
    %461 = vmatpush1.msra.mxu0 0.0
    %462 = vmatprep.subr.mxu0 0.0
    %463 = vmatpush1.msra.mxu0 0.0
    %464 = vmatprep.subr.mxu0 0.0
    %465 = vmatpush1.msra.mxu0 0.0
    %466 = vmatprep.subr.mxu0 0.0
    %467 = vmatpush1.msra.mxu0 0.0
    %468 = vmatprep.subr.mxu0 0.0
    %469 = vmatpush1.msra.mxu0 0.0
    %470 = vmatprep.subr.mxu0 0.0
    %471 = vmatpush1.msra.mxu0 0.0
    %472 = vmatprep.subr.mxu0 0.0
    %473 = vmatpush1.msra.mxu0 0.0
    %474 = vmatprep.subr.mxu0 0.0
    %475 = vmatpush1.msra.mxu0 0.0
    %476 = vmatprep.subr.mxu0 0.0
    %477 = vmatpush1.msra.mxu0 0.0
    %478 = vmatprep.subr.mxu0 0.0
    %479 = vmatpush1.msra.mxu0 0.0
    %480 = vmatprep.subr.mxu0 0.0
    %481 = vmatpush1.msra.mxu0 0.0
    %482 = vmatprep.subr.mxu0 0.0
    %483 = vmatpush1.msra.mxu0 0.0
    %484 = vmatprep.subr.mxu0 0.0
    %485 = vmatpush1.msra.mxu0 0.0
    %486 = vmatprep.subr.mxu0 0.0
    %487 = vmatpush1.msra.mxu0 0.0
    %488 = vmatprep.subr.mxu0 0.0
    %489 = vmatpush1.msra.mxu0 0.0
    %490 = vmatprep.subr.mxu0 0.0
    %491 = vmatpush1.msra.mxu0 0.0
    %492 = vmatprep.subr.mxu0 0.0
    %493 = vmatpush1.msra.mxu0 0.0
    %494 = vmatprep.subr.mxu0 0.0
    %495 = vmatpush1.msra.mxu0 0.0
    %496 = vmatprep.subr.mxu0 0.0
    %497 = vmatpush1.msra.mxu0 0.0
    %498 = vmatprep.subr.mxu0 0.0
    %499 = vmatpush1.msra.mxu0 0.0
    %500 = vmatprep.subr.mxu0 0.0
    %501 = vmatpush1.msra.mxu0 0.0
    %502 = vmatprep.subr.mxu0 0.0
    %503 = vmatpush1.msra.mxu0 0.0
    %504 = vmatprep.subr.mxu0 0.0
    %505 = vmatpush1.msra.mxu0 0.0
    %506 = vmatprep.subr.mxu0 0.0
    %507 = vmatpush1.msra.mxu0 0.0
    %508 = vmatprep.subr.mxu0 0.0
    %509 = vmatpush1.msra.mxu0 0.0
    %510 = vmatprep.subr.mxu0 0.0
    %511 = vmatpush1.msra.mxu0 0.0
    %512 = vmatprep.subr.mxu0 0.0
    %513 = vmatpush1.msra.mxu0 0.0
    %514 = vmatprep.mubr.f32.mxu0 0.0
    %515 = vmatmul.mubr.f32.gmra.mrb[0].mxu0 %v445
    %v516 = vpop.f32.mrb[0].mxu0
    %v517 = vadd.f32 0.0, %v516
    %v518 = vpop.f32.mrb[0].mxu0
    %519 = vmatprep.mubr.f32.mxu0 0.0
    %520 = vmatmul.mubr.f32.gmra.mrb[0].mxu0 %v448
    %v521 = vpop.f32.mrb[0].mxu0
    %v522 = vadd.f32 0.0, %v521
    %v523 = vpop.f32.mrb[0].mxu0
    %524 = vdwg.mxu0
    %525 = vrot.lane.b32.xlu0 %v197, 64
    %v526 = vpop.permute.xlu0 %525
    %527 = vrot.lane.b32.xlu0 %v202, 64
    %v528 = vpop.permute.xlu0 %527
    %v532 = vsel %vm211, %v434, 0
    %v535 = vsel %vm211, %v435, 0
    %537 = vmatprep.subr.mxu0 0.0
    %538 = vmatpush1.msra.mxu0 %v526
    %539 = vmatprep.subr.mxu0 0.0
    %540 = vmatpush1.msra.mxu0 %v528
    %541 = vmatprep.subr.mxu0 0.0
    %542 = vmatpush1.msra.mxu0 0.0
    %543 = vmatprep.subr.mxu0 0.0
    %544 = vmatpush1.msra.mxu0 0.0
    %545 = vmatprep.subr.mxu0 0.0
    %546 = vmatpush1.msra.mxu0 0.0
    %547 = vmatprep.subr.mxu0 0.0
    %548 = vmatpush1.msra.mxu0 0.0
    %549 = vmatprep.subr.mxu0 0.0
    %550 = vmatpush1.msra.mxu0 0.0
    %551 = vmatprep.subr.mxu0 0.0
    %552 = vmatpush1.msra.mxu0 0.0
    %553 = vmatprep.subr.mxu0 0.0
    %554 = vmatpush1.msra.mxu0 0.0
    %555 = vmatprep.subr.mxu0 0.0
    %556 = vmatpush1.msra.mxu0 0.0
    %557 = vmatprep.subr.mxu0 0.0
    %558 = vmatpush1.msra.mxu0 0.0
    %559 = vmatprep.subr.mxu0 0.0
    %560 = vmatpush1.msra.mxu0 0.0
    %561 = vmatprep.subr.mxu0 0.0
    %562 = vmatpush1.msra.mxu0 0.0
    %563 = vmatprep.subr.mxu0 0.0
    %564 = vmatpush1.msra.mxu0 0.0
    %565 = vmatprep.subr.mxu0 0.0
    %566 = vmatpush1.msra.mxu0 0.0
    %567 = vmatprep.subr.mxu0 0.0
    %568 = vmatpush1.msra.mxu0 0.0
    %569 = vmatprep.subr.mxu0 0.0
    %570 = vmatpush1.msra.mxu0 0.0
    %571 = vmatprep.subr.mxu0 0.0
    %572 = vmatpush1.msra.mxu0 0.0
    %573 = vmatprep.subr.mxu0 0.0
    %574 = vmatpush1.msra.mxu0 0.0
    %575 = vmatprep.subr.mxu0 0.0
    %576 = vmatpush1.msra.mxu0 0.0
    %577 = vmatprep.subr.mxu0 0.0
    %578 = vmatpush1.msra.mxu0 0.0
    %579 = vmatprep.subr.mxu0 0.0
    %580 = vmatpush1.msra.mxu0 0.0
    %581 = vmatprep.subr.mxu0 0.0
    %582 = vmatpush1.msra.mxu0 0.0
    %583 = vmatprep.subr.mxu0 0.0
    %584 = vmatpush1.msra.mxu0 0.0
    %585 = vmatprep.subr.mxu0 0.0
    %586 = vmatpush1.msra.mxu0 0.0
    %587 = vmatprep.subr.mxu0 0.0
    %588 = vmatpush1.msra.mxu0 0.0
    %589 = vmatprep.subr.mxu0 0.0
    %590 = vmatpush1.msra.mxu0 0.0
    %591 = vmatprep.subr.mxu0 0.0
    %592 = vmatpush1.msra.mxu0 0.0
    %593 = vmatprep.subr.mxu0 0.0
    %594 = vmatpush1.msra.mxu0 0.0
    %595 = vmatprep.subr.mxu0 0.0
    %596 = vmatpush1.msra.mxu0 0.0
    %597 = vmatprep.subr.mxu0 0.0
    %598 = vmatpush1.msra.mxu0 0.0
    %599 = vmatprep.subr.mxu0 0.0
    %600 = vmatpush1.msra.mxu0 0.0
    %601 = vmatprep.mubr.f32.mxu0 0.0
    %602 = vmatmul.mubr.f32.gmra.mrb[0].mxu0 %v532
    %v603 = vpop.f32.mrb[0].mxu0
    %v604 = vadd.f32 %v517, %v603
    %v605 = vpop.f32.mrb[0].mxu0
    %606 = vmatprep.mubr.f32.mxu0 0.0
    %607 = vmatmul.mubr.f32.gmra.mrb[0].mxu0 %v535
    %v608 = vpop.f32.mrb[0].mxu0
    %v609 = vadd.f32 %v522, %v608
    %v610 = vpop.f32.mrb[0].mxu0
    %611 = vdwg.mxu0
    %v612 = vlaneseq
    %v613 = vshrl.u32 %v612, 7
    %v614 = vsub.s32 4, %v613
    %v615 = vrot.slane %v68, %v614
    %v616 = vadd.f32 %v604, %v615
    %v617 = vadd.f32 %v609, %v615
    %v618 = vadd.f32 %v66, %v616
    %v619 = vadd.f32 %v67, %v617
    %v620 = vsel %vm70, %v618, 0.0
    %621 = vadd.xlane.f32.xlu0 %v620
    %v622 = vpop.xlane.xlu0 %621
    %v623 = vsel %vm70, %v619, 0.0
    %624 = vadd.xlane.f32.xlu0 %v623
    %v625 = vpop.xlane.xlu0 %624
    %v626 = vmul.f32 %v622, %v77
    %v627 = vmul.f32 %v625, %v77
    %v628 = vmul.f32 %v618, %v618
    %v629 = vmul.f32 %v619, %v619
    %v630 = vsel %vm70, %v628, 0.0
    %631 = vadd.xlane.f32.xlu0 %v630
    %v632 = vpop.xlane.xlu0 %631
    %v633 = vsel %vm70, %v629, 0.0
    %634 = vadd.xlane.f32.xlu0 %v633
    %v635 = vpop.xlane.xlu0 %634
    %v636 = vmul.f32 %v632, %v77
    %v637 = vmul.f32 %v635, %v77
    %v638 = vmul.f32 %v626, %v626
    %v639 = vmul.f32 %v627, %v627
    %v640 = vsub.f32 %v636, %v638
    %v641 = vsub.f32 %v637, %v639
    %v642 = vadd.f32 %v640, 1e-05
    %v643 = vadd.f32 %v641, 1e-05
    %v644 = vrsqrt.pop %v642
    %v645 = vrsqrt.pop %v643
    %v646 = vlaneseq
    %v647 = vshrl.u32 %v646, 7
    %v648 = vsub.s32 2, %v647
    %v649 = vrot.slane %v68, %v648
    %v650 = vmul.f32 %v649, %v644
    %v651 = vmul.f32 %v649, %v645
    %v652 = vmul.f32 %v618, %v650
    %v653 = vmul.f32 %v619, %v651
    %v654 = vmul.f32 %v626, %v650
    %v655 = vmul.f32 %v627, %v651
    %v656 = vlaneseq
    %v657 = vshrl.u32 %v656, 7
    %v658 = vsub.s32 3, %v657
    %v659 = vrot.slane %v68, %v658
    %v660 = vsub.f32 %v659, %v654
    %v661 = vsub.f32 %v659, %v655
    %v662 = vadd.f32 %v652, %v660
    %v663 = vadd.f32 %v653, %v661
    %v664 = vld [vmem:[#allocation2] sm:$0xff]
    %v665 = vld [vmem:[#allocation2 + $0x8] sm:$0xff]
    %v666 = vld [vmem:[#allocation2 + $0x10] sm:$0xff]
    %v667 = vld [vmem:[#allocation2 + $0x18] sm:$0xff]
    %v668 = vlaneseq
    %v669 = vshrl.u32 %v668, 7
    %v670 = vsub.s32 1, %v669
    %v671 = vrot.slane %v69, %v670
    %v673 = vsel %vm70, %v662, 0
    %v676 = vsel %vm70, %v663, 0
    %678 = vmatprep.subr.mxu0 0.0
    %679 = vmatpush1.msra.mxu0 %v664
    %680 = vmatprep.subr.mxu0 0.0
    %681 = vmatpush1.msra.mxu0 %v665
    %682 = vmatprep.subr.mxu0 0.0
    %683 = vmatpush1.msra.mxu0 %v666
    %684 = vmatprep.subr.mxu0 0.0
    %685 = vmatpush1.msra.mxu0 %v667
    %686 = vmatprep.subr.mxu0 0.0
    %687 = vmatpush1.msra.mxu0 0.0
    %688 = vmatprep.subr.mxu0 0.0
    %689 = vmatpush1.msra.mxu0 0.0
    %690 = vmatprep.subr.mxu0 0.0
    %691 = vmatpush1.msra.mxu0 0.0
    %692 = vmatprep.subr.mxu0 0.0
    %693 = vmatpush1.msra.mxu0 0.0
    %694 = vmatprep.subr.mxu0 0.0
    %695 = vmatpush1.msra.mxu0 0.0
    %696 = vmatprep.subr.mxu0 0.0
    %697 = vmatpush1.msra.mxu0 0.0
    %698 = vmatprep.subr.mxu0 0.0
    %699 = vmatpush1.msra.mxu0 0.0
    %700 = vmatprep.subr.mxu0 0.0
    %701 = vmatpush1.msra.mxu0 0.0
    %702 = vmatprep.subr.mxu0 0.0
    %703 = vmatpush1.msra.mxu0 0.0
    %704 = vmatprep.subr.mxu0 0.0
    %705 = vmatpush1.msra.mxu0 0.0
    %706 = vmatprep.subr.mxu0 0.0
    %707 = vmatpush1.msra.mxu0 0.0
    %708 = vmatprep.subr.mxu0 0.0
    %709 = vmatpush1.msra.mxu0 0.0
    %710 = vmatprep.subr.mxu0 0.0
    %711 = vmatpush1.msra.mxu0 0.0
    %712 = vmatprep.subr.mxu0 0.0
    %713 = vmatpush1.msra.mxu0 0.0
    %714 = vmatprep.subr.mxu0 0.0
    %715 = vmatpush1.msra.mxu0 0.0
    %716 = vmatprep.subr.mxu0 0.0
    %717 = vmatpush1.msra.mxu0 0.0
    %718 = vmatprep.subr.mxu0 0.0
    %719 = vmatpush1.msra.mxu0 0.0
    %720 = vmatprep.subr.mxu0 0.0
    %721 = vmatpush1.msra.mxu0 0.0
    %722 = vmatprep.subr.mxu0 0.0
    %723 = vmatpush1.msra.mxu0 0.0
    %724 = vmatprep.subr.mxu0 0.0
    %725 = vmatpush1.msra.mxu0 0.0
    %726 = vmatprep.subr.mxu0 0.0
    %727 = vmatpush1.msra.mxu0 0.0
    %728 = vmatprep.subr.mxu0 0.0
    %729 = vmatpush1.msra.mxu0 0.0
    %730 = vmatprep.subr.mxu0 0.0
    %731 = vmatpush1.msra.mxu0 0.0
    %732 = vmatprep.subr.mxu0 0.0
    %733 = vmatpush1.msra.mxu0 0.0
    %734 = vmatprep.subr.mxu0 0.0
    %735 = vmatpush1.msra.mxu0 0.0
    %736 = vmatprep.subr.mxu0 0.0
    %737 = vmatpush1.msra.mxu0 0.0
    %738 = vmatprep.subr.mxu0 0.0
    %739 = vmatpush1.msra.mxu0 0.0
    %740 = vmatprep.subr.mxu0 0.0
    %741 = vmatpush1.msra.mxu0 0.0
    %742 = vmatprep.mubr.f32.mxu0 0.0
    %743 = vmatmul.mubr.f32.gmra.mrb[0].mxu0 %v673
    %v744 = vpop.f32.mrb[0].mxu0
    %v745 = vadd.f32 %v671, %v744
    %v746 = vpop.f32.mrb[0].mxu0
    %747 = vmatprep.mubr.f32.mxu0 0.0
    %748 = vmatmul.mubr.f32.gmra.mrb[0].mxu0 %v676
    %v749 = vpop.f32.mrb[0].mxu0
    %v750 = vadd.f32 %v671, %v749
    %v751 = vpop.f32.mrb[0].mxu0
    %752 = vdwg.mxu0
    %v753 = vxor.u32 %v745, 2147483648
    %v754 = vxor.u32 %v750, 2147483648
    %v755 = vmul.f32 %v753, 1.442695
    %v756 = vpow.pop %v755
    %v757 = vmul.f32 %v754, 1.442695
    %v758 = vpow.pop %v757
    %v759 = vadd.f32 %v756, 1.0
    %v760 = vadd.f32 %v758, 1.0
    %v761 = vrcp.pop %v759
    %v762 = vmul.f32 1.0, %v761
    %v763 = vrcp.pop %v760
    %v764 = vmul.f32 1.0, %v763
    %v765 = vmul.f32 %v745, %v762
    %v766 = vmul.f32 %v750, %v764
    %v767 = vld [vmem:[#allocation5] sm:$0xff]
    %v768 = vld [vmem:[#allocation5 + $0x8] sm:$0xff]
    %v769 = vld [vmem:[#allocation5 + $0x10] sm:$0xff]
    %v770 = vld [vmem:[#allocation5 + $0x18] sm:$0xff]
    %v771 = vlaneseq
    %v772 = vshrl.u32 %v771, 7
    %v773 = vsub.s32 5, %v772
    %v774 = vrot.slane %v68, %v773
    %775 = vmatprep.subr.mxu0 0.0
    %776 = vmatpush1.xpose.msra.mxu0 %v767
    %777 = vmatprep.subr.mxu0 0.0
    %778 = vmatpush1.xpose.msra.mxu0 %v768
    %779 = vmatprep.subr.mxu0 0.0
    %780 = vmatpush1.xpose.msra.mxu0 %v769
    %781 = vmatprep.subr.mxu0 0.0
    %782 = vmatpush1.xpose.msra.mxu0 %v770
    %783 = vmatprep.subr.mxu0 0.0
    %784 = vmatpush1.xpose.msra.mxu0 0.0
    %785 = vmatprep.subr.mxu0 0.0
    %786 = vmatpush1.xpose.msra.mxu0 0.0
    %787 = vmatprep.subr.mxu0 0.0
    %788 = vmatpush1.xpose.msra.mxu0 0.0
    %789 = vmatprep.subr.mxu0 0.0
    %790 = vmatpush1.xpose.msra.mxu0 0.0
    %791 = vmatprep.subr.mxu0 0.0
    %792 = vmatpush1.xpose.msra.mxu0 0.0
    %793 = vmatprep.subr.mxu0 0.0
    %794 = vmatpush1.xpose.msra.mxu0 0.0
    %795 = vmatprep.subr.mxu0 0.0
    %796 = vmatpush1.xpose.msra.mxu0 0.0
    %797 = vmatprep.subr.mxu0 0.0
    %798 = vmatpush1.xpose.msra.mxu0 0.0
    %799 = vmatprep.subr.mxu0 0.0
    %800 = vmatpush1.xpose.msra.mxu0 0.0
    %801 = vmatprep.subr.mxu0 0.0
    %802 = vmatpush1.xpose.msra.mxu0 0.0
    %803 = vmatprep.subr.mxu0 0.0
    %804 = vmatpush1.xpose.msra.mxu0 0.0
    %805 = vmatprep.subr.mxu0 0.0
    %806 = vmatpush1.xpose.msra.mxu0 0.0
    %807 = vmatprep.subr.mxu0 0.0
    %808 = vmatpush1.xpose.msra.mxu0 0.0
    %809 = vmatprep.subr.mxu0 0.0
    %810 = vmatpush1.xpose.msra.mxu0 0.0
    %811 = vmatprep.subr.mxu0 0.0
    %812 = vmatpush1.xpose.msra.mxu0 0.0
    %813 = vmatprep.subr.mxu0 0.0
    %814 = vmatpush1.xpose.msra.mxu0 0.0
    %815 = vmatprep.subr.mxu0 0.0
    %816 = vmatpush1.xpose.msra.mxu0 0.0
    %817 = vmatprep.subr.mxu0 0.0
    %818 = vmatpush1.xpose.msra.mxu0 0.0
    %819 = vmatprep.subr.mxu0 0.0
    %820 = vmatpush1.xpose.msra.mxu0 0.0
    %821 = vmatprep.subr.mxu0 0.0
    %822 = vmatpush1.xpose.msra.mxu0 0.0
    %823 = vmatprep.subr.mxu0 0.0
    %824 = vmatpush1.xpose.msra.mxu0 0.0
    %825 = vmatprep.subr.mxu0 0.0
    %826 = vmatpush1.xpose.msra.mxu0 0.0
    %827 = vmatprep.subr.mxu0 0.0
    %828 = vmatpush1.xpose.msra.mxu0 0.0
    %829 = vmatprep.subr.mxu0 0.0
    %830 = vmatpush1.xpose.msra.mxu0 0.0
    %831 = vmatprep.subr.mxu0 0.0
    %832 = vmatpush1.xpose.msra.mxu0 0.0
    %833 = vmatprep.subr.mxu0 0.0
    %834 = vmatpush1.xpose.msra.mxu0 0.0
    %835 = vmatprep.subr.mxu0 0.0
    %836 = vmatpush1.xpose.msra.mxu0 0.0
    %837 = vmatprep.subr.mxu0 0.0
    %838 = vmatpush1.xpose.msra.mxu0 0.0
    %839 = vmatprep.mubr.f32.mxu0 0.0
    %840 = vmatmul.mubr.f32.gmra.mrb[0].mxu0 %v765
    %v841 = vpop.f32.mrb[0].mxu0
    %v842 = vadd.f32 %v774, %v841
    %v843 = vpop.f32.mrb[0].mxu0
    %844 = vmatprep.mubr.f32.mxu0 0.0
    %845 = vmatmul.mubr.f32.gmra.mrb[0].mxu0 %v766
    %v846 = vpop.f32.mrb[0].mxu0
    %v847 = vadd.f32 %v774, %v846
    %v848 = vpop.f32.mrb[0].mxu0
    %849 = vdwg.mxu0
    %v850 = vadd.f32 %v618, %v842
    %v851 = vadd.f32 %v619, %v847
    %852 = vst.msk [vmem:[#allocation8] sm:$0xff] %vm70, %v850
    %853 = vst.msk [vmem:[#allocation8 + $0x8] sm:$0xff] %vm70, %v851
    // Predicated region
    $region42: #{tpu_custom_call.1} parent=1 // pred_check
      _
    $region43: #{tpu_custom_call.1} parent=1 // pred_check_branch
      %855 = sbr.rel (0) target = $region45
    $region44: #{tpu_custom_call.1} parent=1 // pred_region
      %s857 = ssub.s32 256, 256
      %858 = vsyncadd [#allocation4], %s857
      %s859 = sshll.u32 [#allocation8], 4
      %s860 = int_to_ptr.vmem [resolvable:$true] %s859
      %865 = dma.vmem_to_hbm [thread:$0]  %s860, 256, %s7, [#allocation4], 128, 128, 8
    $region45: #{tpu_custom_call.1} parent=1 // pred_fallthru
      _
    // Predicated region
    $region46: #{tpu_custom_call.1} parent=1 // pred_check
      _
    $region47: #{tpu_custom_call.1} parent=1 // pred_check_branch
      %867 = sbr.rel (0) target = $region49
    $region48: #{tpu_custom_call.1} parent=1 // pred_region
      %868 = dma.done [#allocation4], 256
    $region49: #{tpu_custom_call.1} parent=1 // pred_fallthru
      _
    %869 = vsyncpa [#allocation3], 1
    %870 = vsyncpa [#allocation6], 1
    %871 = vsyncpa [#allocation4], 1

</llo_original>
